<compile_context>
chip_gen: v7x
topology: tpu7x:2x2x1
jax: 0.10.0
libtpu: 0.0.40
codegen_flags: <defaults>
</compile_context>

<pallas_src>
import math

import jax
import jax.numpy as jnp
from jax import lax
from jax.experimental import pallas as pl
from jax.experimental.pallas import tpu as pltpu

_EPS_SQ = 1e-24                               # (F.normalize eps = 1e-12) ** 2
_CONTRACT_LAST = (((1,), (1,)), ((), ()))     # A(m,k) x B(n,k) -> (m,n)


def _factor_normalize_cols(v, fsel, fexp):
    """Per-factor-chunk L2 normalization of v: (dim_E, T), along the dim_E axis."""
    # TODO(synk): if this becomes MXU-extended-slot bound after the HBM fixes,
    # replace the tiny-K selector matmuls with sublane-segment reduce/broadcast.
    ssq = jnp.dot(fexp, v * v, preferred_element_type=jnp.float32)      # (nf, T)
    inv = lax.rsqrt(jnp.maximum(ssq, _EPS_SQ))                          # EUP
    return v * jnp.dot(fsel, inv, preferred_element_type=jnp.float32)   # (dim_E, T)


def dgcf_conv_kernel(xT_ref, fsel_ref, fexp_ref, oh0_ref, oh1_ref, norm_ref,
                     out_ref, tn_ref):
    """One edge tile of the fused (all-factor, both-direction) DGCF convolution."""
    t = pl.program_id(1)

    @pl.when(t == 0)
    def _init():
        out_ref[...] = jnp.zeros_like(out_ref)

    xT = xT_ref[...]                               # (dim_E, N) bf16, resident
    oh0 = oh0_ref[...].astype(jnp.bfloat16)        # (T, N) one-hot(ec0), int8 -> bf16
    oh1 = oh1_ref[...].astype(jnp.bfloat16)        # (T, N) one-hot(ec1)
    fsel = fsel_ref[...]                           # (dim_E, nf)
    fexp = fexp_ref[...]                           # (nf, dim_E)
    norm_nf = norm_ref[...]                        # (nf, T) per-edge, per-factor coeff

    # Gather layer-input embeddings at both endpoints (lane-dense (dim_E, T)).
    g0 = lax.dot_general(xT, oh0, _CONTRACT_LAST, preferred_element_type=jnp.float32)
    g1 = lax.dot_general(xT, oh1, _CONTRACT_LAST, preferred_element_type=jnp.float32)

    # Score-path side output: tanh(per-factor-normalized OLD embeddings at ec1).
    tn_ref[...] = jnp.tanh(_factor_normalize_cols(g1, fsel, fexp)).astype(tn_ref.dtype)

    # Expand the per-edge, per-factor coefficient over each d_f chunk, form messages.
    norm_dim = jnp.dot(fsel, norm_nf, preferred_element_type=jnp.float32)  # (dim_E, T)
    msg0 = (norm_dim * g0).astype(jnp.bfloat16)    # messages ec0 -> ec1
    msg1 = (norm_dim * g1).astype(jnp.bfloat16)    # messages ec1 -> ec0

    # Scatter-add both directions into the per-split resident f32 accumulator.
    scat = (jnp.dot(msg0, oh1, preferred_element_type=jnp.float32)
            + jnp.dot(msg1, oh0, preferred_element_type=jnp.float32))     # (dim_E, N)
    out_ref[...] += scat[None, :, :]


def dgcf_score_kernel(oh0_ref, outT_ref, ti_ref, fsel_ref, fexp_ref, sval_ref):
    """sval[k, e] = <normalize_k(out[:, ec0[e]]), tanh(normalize_k(x[:, ec1[e]]))>."""
    oh0 = oh0_ref[...].astype(jnp.bfloat16)                              # (T, N)
    u = lax.dot_general(outT_ref[...], oh0, _CONTRACT_LAST,
                        preferred_element_type=jnp.float32)              # (dim_E, T)
    p = _factor_normalize_cols(u, fsel_ref[...], fexp_ref[...]) * ti_ref[...]
    sval_ref[...] = jnp.dot(fexp_ref[...], p,
                            preferred_element_type=jnp.float32).astype(sval_ref.dtype)


# --------------------------------------------------------------------------- #
# VMEM sizing helpers
# --------------------------------------------------------------------------- #
def _conv_vmem_estimate(edge_tile, N, dim_E, nf):
    db = 2                                              # BlockSpec double buffering
    onehot_int8 = db * 2 * edge_tile * N                # oh0 + oh1 tiles
    onehot_bf16 = 2 * edge_tile * N * 2                 # in-kernel bf16 copies
    tn = db * dim_E * edge_tile * 4
    norm = db * nf * edge_tile * 4
    resident = db * dim_E * N * (2 + 4)                 # xT bf16 + f32 accumulator block
    temps = 10 * dim_E * edge_tile * 4                  # g0/g1/norm_dim/msg/tanh temps
    return onehot_int8 + onehot_bf16 + tn + norm + resident + temps


def _choose_edge_tile(E, N, dim_E, nf, n_splits, vmem_budget):
    tile = 128
    for cand in (256, 512, 1024):                       # bigger tiles amortize the
        if _conv_vmem_estimate(cand, N, dim_E, nf) <= vmem_budget:   # ~0.35us/step cost
            tile = cand
    need = 128 * max(1, pl.cdiv(E, 128 * n_splits))     # don't over-pad tiny edge lists
    return int(min(tile, need))


def _vmem_limit_bytes(edge_tile, N, dim_E, nf):
    est = _conv_vmem_estimate(edge_tile, N, dim_E, nf)
    # Generous headroom, but stay below v7x's 64 MiB physical VMEM.
    return int(min(max(32 * 2**20, 2 * est), 60 * 2**20))


# --------------------------------------------------------------------------- #
# pallas_call wrappers
# --------------------------------------------------------------------------- #
def dgcf_conv(xT_bf16, oh0, oh1, norm_nfT, fsel, fexp, edge_tile, n_splits, vmem_limit):
    dim_E, N = xT_bf16.shape
    E_pad = oh0.shape[0]
    nf = fexp.shape[0]
    assert E_pad % (edge_tile * n_splits) == 0
    tps = E_pad // (edge_tile * n_splits)               # tiles per split

    return pl.pallas_call(
        dgcf_conv_kernel,
        out_shape=(jax.ShapeDtypeStruct((n_splits, dim_E, N), jnp.float32),
                   jax.ShapeDtypeStruct((dim_E, E_pad), jnp.float32)),
        grid=(n_splits, tps),
        in_specs=[
            pl.BlockSpec((dim_E, N), lambda c, t: (0, 0)),                   # xT (resident)
            pl.BlockSpec((dim_E, nf), lambda c, t: (0, 0)),                  # fsel
            pl.BlockSpec((nf, dim_E), lambda c, t: (0, 0)),                  # fexp
            pl.BlockSpec((edge_tile, N), lambda c, t: (c * tps + t, 0)),     # one-hot(ec0)
            pl.BlockSpec((edge_tile, N), lambda c, t: (c * tps + t, 0)),     # one-hot(ec1)
            pl.BlockSpec((nf, edge_tile), lambda c, t: (0, c * tps + t)),    # norm * S
        ],
        out_specs=(
            pl.BlockSpec((1, dim_E, N), lambda c, t: (c, 0, 0)),             # per-split acc
            pl.BlockSpec((dim_E, edge_tile), lambda c, t: (0, c * tps + t)),  # tanh(norm(x[ec1]))
        ),
        compiler_params=pltpu.CompilerParams(
            dimension_semantics=("parallel", "arbitrary"),
            vmem_limit_bytes=vmem_limit),
    )(xT_bf16, fsel, fexp, oh0, oh1, norm_nfT)


def dgcf_score(oh0, outT_bf16, tnT, fsel, fexp, edge_tile, vmem_limit):
    E_pad, N = oh0.shape
    dim_E = outT_bf16.shape[0]
    nf = fexp.shape[0]
    assert E_pad % edge_tile == 0
    return pl.pallas_call(
        dgcf_score_kernel,
        out_shape=jax.ShapeDtypeStruct((nf, E_pad), jnp.float32),
        grid=(E_pad // edge_tile,),
        in_specs=[
            pl.BlockSpec((edge_tile, N), lambda t: (t, 0)),                  # one-hot(ec0)
            pl.BlockSpec((dim_E, N), lambda t: (0, 0)),                      # new embs (resident)
            pl.BlockSpec((dim_E, edge_tile), lambda t: (0, t)),              # tanh(norm(x[ec1]))
            pl.BlockSpec((dim_E, nf), lambda t: (0, 0)),
            pl.BlockSpec((nf, dim_E), lambda t: (0, 0)),
        ],
        out_specs=pl.BlockSpec((nf, edge_tile), lambda t: (0, t)),           # lane-dense scores
        compiler_params=pltpu.CompilerParams(
            dimension_semantics=("parallel",),
            vmem_limit_bytes=vmem_limit),
    )(oh0, outT_bf16, tnT, fsel, fexp)


# --------------------------------------------------------------------------- #
# Forward pass (replicates DGCF.forward)
# --------------------------------------------------------------------------- #
def dgcf_forward(user_emb, item_emb, edge_clone, n_factors, n_iterations, n_layers,
                 edge_tile=None, n_edge_splits=2, vmem_budget_bytes=44 * 2**20):
    """Returns (user_embs, item_embs, S)."""
    num_user, dim_E = user_emb.shape
    num_item = item_emb.shape[0]
    assert dim_E % n_factors == 0
    N = num_user + num_item
    E = int(edge_clone.shape[1])

    if edge_tile is None:
        edge_tile = _choose_edge_tile(E, N, dim_E, n_factors, n_edge_splits,
                                      vmem_budget_bytes)
    assert edge_tile % 128 == 0
    vmem_limit = _vmem_limit_bytes(edge_tile, N, dim_E, n_factors)

    # Pad the edge axis; padded edges get node id N (all-zero one-hot) and zero norm.
    span = edge_tile * n_edge_splits
    E_pad = pl.cdiv(E, span) * span
    pad = E_pad - E
    ec0 = jnp.concatenate([edge_clone[0].astype(jnp.int32),
                           jnp.full((pad,), N, jnp.int32)])
    ec1 = jnp.concatenate([edge_clone[1].astype(jnp.int32),
                           jnp.full((pad,), N, jnp.int32)])
    valid = jnp.concatenate([jnp.ones((E,), jnp.float32),
                             jnp.zeros((pad,), jnp.float32)])

    # Symmetric degree normalization (constant across layers / iterations).
    deg = (jnp.zeros((N,), jnp.float32)
           .at[edge_clone[0]].add(1.0)
           .at[edge_clone[1]].add(1.0))
    dinv = jnp.where(deg > 0, deg ** -0.5, 0.0)
    norm_e = dinv[jnp.clip(ec0, 0, N - 1)] * dinv[jnp.clip(ec1, 0, N - 1)] * valid

    # int8 one-hot gather/scatter operands (0/1 exact; upcast to bf16 in-kernel).
    node_ids = jnp.arange(N, dtype=jnp.int32)
    oh0 = (ec0[:, None] == node_ids[None, :]).astype(jnp.int8)     # (E_pad, N)
    oh1 = (ec1[:, None] == node_ids[None, :]).astype(jnp.int8)     # (E_pad, N)

    # Factor-chunk expander / selector (block one-hot between nf and dim_E).
    d_f = dim_E // n_factors
    fexp = (jnp.arange(dim_E)[None, :] // d_f
            == jnp.arange(n_factors)[:, None]).astype(jnp.float32)  # (nf, dim_E)
    fsel = fexp.T                                                    # (dim_E, nf)

    egoT = jnp.concatenate([user_emb, item_emb], axis=0).T           # (dim_E, N) f32
    S = jnp.ones((n_factors, E), jnp.float32)

    all_embs = [egoT]
    for _layer in range(n_layers):
        xT_bf16 = egoT.astype(jnp.bfloat16)       # layer input, fixed across iterations
        layer_out = None
        for _t in range(n_iterations):
            S = jax.nn.softmax(S, axis=0)
            s_pad = jnp.pad(S, ((0, 0), (0, pad)))
            norm_nfT = norm_e[None, :] * s_pad                       # (nf, E_pad)

            out_parts, tnT = dgcf_conv(xT_bf16, oh0, oh1, norm_nfT, fsel, fexp,
                                       edge_tile, n_edge_splits, vmem_limit)
            outT = jnp.sum(out_parts, axis=0)                        # (dim_E, N) f32
            sval = dgcf_score(oh0, outT.astype(jnp.bfloat16), tnT, fsel, fexp,
                              edge_tile, vmem_limit)                 # (nf, E_pad)
            S = S + sval[:, :E]
            layer_out = outT
        egoT = layer_out
        all_embs.append(egoT)

    total = jnp.sum(jnp.stack(all_embs, axis=0), axis=0).T            # (N, dim_E)
    return total[:num_user], total[num_user:], S


# --------------------------------------------------------------------------- #
# Pure-JAX reference (same bf16 cast points as the Pallas kernels)
# --------------------------------------------------------------------------- #
def dgcf_forward_ref(user_emb, item_emb, edge_clone, n_factors, n_iterations, n_layers):
    num_user, dim_E = user_emb.shape
    num_item = item_emb.shape[0]
    d_f = dim_E // n_factors
    N = num_user + num_item
    row = jnp.concatenate([edge_clone[0], edge_clone[1]])
    col = jnp.concatenate([edge_clone[1], edge_clone[0]])
    deg = jnp.zeros((N,), jnp.float32).at[row].add(1.0)
    dinv = jnp.where(deg > 0, deg ** -0.5, 0.0)
    norm_base = dinv[row] * dinv[col]

    def norm_chunks(v):
        v3 = v.reshape(v.shape[0], n_factors, d_f)
        ssq = jnp.sum(v3 * v3, axis=-1, keepdims=True)
        return (v3 * lax.rsqrt(jnp.maximum(ssq, _EPS_SQ))).reshape(v.shape)

    ego = jnp.concatenate([user_emb, item_emb], axis=0)
    S = jnp.ones((n_factors, edge_clone.shape[1]), jnp.float32)
    all_embs = [ego]
    for _layer in range(n_layers):
        xb = ego.astype(jnp.bfloat16).astype(jnp.float32)
        layer_out = None
        for _t in range(n_iterations):
            S = jax.nn.softmax(S, axis=0)
            s2 = jnp.concatenate([S, S], axis=1)                        # (nf, 2E)
            outs = []
            for k in range(n_factors):
                xk = xb[:, k * d_f:(k + 1) * d_f]
                msg = ((norm_base * s2[k])[:, None] * xk[row]).astype(jnp.bfloat16)
                outs.append(jnp.zeros((N, d_f), jnp.float32)
                            .at[col].add(msg.astype(jnp.float32)))
            out = jnp.concatenate(outs, axis=1)
            ob = out.astype(jnp.bfloat16).astype(jnp.float32)
            u_n = norm_chunks(ob[edge_clone[0]])
            i_n = norm_chunks(xb[edge_clone[1]])
            p = u_n * jnp.tanh(i_n)
            sval = jnp.stack([jnp.sum(p[:, k * d_f:(k + 1) * d_f], axis=-1)
                              for k in range(n_factors)], axis=0)
            S = S + sval
            layer_out = out
        ego = layer_out
        all_embs.append(ego)
    total = jnp.sum(jnp.stack(all_embs, axis=0), axis=0)
    return total[:num_user], total[num_user:], S


def xavier_uniform(key, shape):
    fan_out, fan_in = shape
    bound = math.sqrt(6.0 / (fan_in + fan_out))
    return jax.random.uniform(key, shape, jnp.float32, -bound, bound)


if __name__ == "__main__":
    num_user, num_item = 8, 12
    dim_E = 16
    n_factors = 4          # dim_E % n_factors == 0
    n_iterations = 2
    n_layers = 2
    E = 24
    N = num_user + num_item

    key = jax.random.PRNGKey(0)
    ku, ki = jax.random.split(key)
    user_emb = xavier_uniform(ku, (num_user, dim_E))
    item_emb = xavier_uniform(ki, (num_item, dim_E))

    # deterministic bipartite edges: (user_id, item_id + num_user)
    e = jnp.arange(E)
    edge_users = e % num_user
    edge_items = (e * 5) % num_item + num_user
    edge_clone = jnp.stack([edge_users, edge_items], axis=0).astype(jnp.int32)  # (2, E)

    u_out, i_out, S_out = dgcf_forward(
        user_emb, item_emb, edge_clone, n_factors, n_iterations, n_layers)
    jax.block_until_ready((u_out, i_out, S_out))

    assert u_out.shape == (num_user, dim_E)
    assert i_out.shape == (num_item, dim_E)
    assert S_out.shape == (n_factors, E)

    # Numerical check against a pure-JAX reference with the same bf16 roundings.
    u_ref, i_ref, S_ref = dgcf_forward_ref(
        user_emb, item_emb, edge_clone, n_factors, n_iterations, n_layers)
    assert bool(jnp.allclose(u_out, u_ref, rtol=2e-2, atol=2e-3)), "user emb mismatch"
    assert bool(jnp.allclose(i_out, i_ref, rtol=2e-2, atol=2e-3)), "item emb mismatch"
    assert bool(jnp.allclose(S_out, S_ref, rtol=2e-2, atol=2e-3)), "intent score mismatch"

    print("KERNEL_OK")
</pallas_src>

<mosaic_0001>
module attributes {stable_mosaic.version = 11 : i64} {
  func.func @dgcf_conv_kernel(%arg0: i32, %arg1: i32, %arg2: memref<16x20xbf16, #tpu.memory_space<vmem>>, %arg3: memref<16x4xf32, #tpu.memory_space<vmem>>, %arg4: memref<4x16xf32, #tpu.memory_space<vmem>>, %arg5: memref<128x20xi8, #tpu.memory_space<vmem>>, %arg6: memref<128x20xi8, #tpu.memory_space<vmem>>, %arg7: memref<4x128xf32, #tpu.memory_space<vmem>>, %arg8: memref<1x16x20xf32, #tpu.memory_space<vmem>>, %arg9: memref<16x128xf32, #tpu.memory_space<vmem>>) attributes {dimension_semantics = [#tpu.dimension_semantics<parallel>, #tpu.dimension_semantics<arbitrary>], iteration_bounds = array<i64: 2, 1>, scalar_prefetch = 0 : i64, scratch_operands = 0 : i64, tpu.core_type = #tpu.core_type<tc>, window_params = [{pipeline_mode = #tpu.pipeline_mode<synchronous>, transform_indices = @transform_0, window_bounds = array<i64: 16, 20>}, {pipeline_mode = #tpu.pipeline_mode<synchronous>, transform_indices = @transform_1, window_bounds = array<i64: 16, 4>}, {pipeline_mode = #tpu.pipeline_mode<synchronous>, transform_indices = @transform_2, window_bounds = array<i64: 4, 16>}, {transform_indices = @transform_3, window_bounds = array<i64: 128, 20>}, {transform_indices = @transform_4, window_bounds = array<i64: 128, 20>}, {transform_indices = @transform_5, window_bounds = array<i64: 4, 128>}, {transform_indices = @transform_6, window_bounds = array<i64: 1, 16, 20>}, {transform_indices = @transform_7, window_bounds = array<i64: 16, 128>}]} {
    %c0_i32 = arith.constant 0 : i32
    %0 = arith.cmpi eq, %arg1, %c0_i32 : i32
    %1 = arith.extui %0 : i1 to i32
    %c0_i32_0 = arith.constant 0 : i32
    %2 = arith.cmpi ne, %1, %c0_i32_0 : i32
    scf.if %2 {
      %cst_27 = arith.constant 0.000000e+00 : f32
      %34 = vector.broadcast %cst_27 : f32 to vector<1x16x20xf32>
      %c0_28 = arith.constant 0 : index
      %c0_29 = arith.constant 0 : index
      %c0_30 = arith.constant 0 : index
      %35 = vector.load %arg8[%c0_28, %c0_29, %c0_30] : memref<1x16x20xf32, #tpu.memory_space<vmem>>, vector<1x16x20xf32>
      tpu.vector_store %arg8[%c0_28, %c0_29, %c0_30], %34 {strides = array<i32>} : memref<1x16x20xf32, #tpu.memory_space<vmem>>, vector<1x16x20xf32>,
    } else {
    }
    %c0 = arith.constant 0 : index
    %c0_1 = arith.constant 0 : index
    %3 = vector.load %arg2[%c0, %c0_1] : memref<16x20xbf16, #tpu.memory_space<vmem>>, vector<16x20xbf16>
    %c0_2 = arith.constant 0 : index
    %c0_3 = arith.constant 0 : index
    %4 = vector.load %arg5[%c0_2, %c0_3] : memref<128x20xi8, #tpu.memory_space<vmem>>, vector<128x20xi8>
    %5 = arith.sitofp %4 : vector<128x20xi8> to vector<128x20xbf16>
    %c0_4 = arith.constant 0 : index
    %c0_5 = arith.constant 0 : index
    %6 = vector.load %arg6[%c0_4, %c0_5] : memref<128x20xi8, #tpu.memory_space<vmem>>, vector<128x20xi8>
    %7 = arith.sitofp %6 : vector<128x20xi8> to vector<128x20xbf16>
    %c0_6 = arith.constant 0 : index
    %c0_7 = arith.constant 0 : index
    %8 = vector.load %arg3[%c0_6, %c0_7] : memref<16x4xf32, #tpu.memory_space<vmem>>, vector<16x4xf32>
    %c0_8 = arith.constant 0 : index
    %c0_9 = arith.constant 0 : index
    %9 = vector.load %arg4[%c0_8, %c0_9] : memref<4x16xf32, #tpu.memory_space<vmem>>, vector<4x16xf32>
    %c0_10 = arith.constant 0 : index
    %c0_11 = arith.constant 0 : index
    %10 = vector.load %arg7[%c0_10, %c0_11] : memref<4x128xf32, #tpu.memory_space<vmem>>, vector<4x128xf32>
    %cst = arith.constant dense<0.000000e+00> : vector<16x128xf32>
    %11 = tpu.matmul %3, %5, %cst {dimension_numbers = #tpu.dot_dimension_numbers<[1], [1], [0], [0], [0, 0, 1, 0], [], []>} : vector<16x20xbf16>, vector<128x20xbf16>, vector<16x128xf32> -> vector<16x128xf32>
    %cst_12 = arith.constant dense<0.000000e+00> : vector<16x128xf32>
    %12 = tpu.matmul %3, %7, %cst_12 {dimension_numbers = #tpu.dot_dimension_numbers<[1], [1], [0], [0], [0, 0, 1, 0], [], []>} : vector<16x20xbf16>, vector<128x20xbf16>, vector<16x128xf32> -> vector<16x128xf32>
    %13 = arith.mulf %12, %12 : vector<16x128xf32>
    %cst_13 = arith.constant dense<0.000000e+00> : vector<4x128xf32>
    %14 = tpu.matmul %9, %13, %cst_13 {dimension_numbers = #tpu.dot_dimension_numbers<[1], [0], [0], [1], [0, 0, 1, 1], [], []>} : vector<4x16xf32>, vector<16x128xf32>, vector<4x128xf32> -> vector<4x128xf32>
    %cst_14 = arith.constant 1.000000e-24 : f32
    %15 = vector.broadcast %cst_14 : f32 to vector<4x128xf32>
    %16 = arith.maximumf %14, %15 : vector<4x128xf32>
    %17 = math.rsqrt %16 : vector<4x128xf32>
    %cst_15 = arith.constant dense<0.000000e+00> : vector<16x128xf32>
    %18 = tpu.matmul %8, %17, %cst_15 {dimension_numbers = #tpu.dot_dimension_numbers<[1], [0], [0], [1], [0, 0, 1, 1], [], []>} : vector<16x4xf32>, vector<4x128xf32>, vector<16x128xf32> -> vector<16x128xf32>
    %19 = arith.mulf %12, %18 : vector<16x128xf32>
    %20 = math.tanh %19 : vector<16x128xf32>
    %c0_16 = arith.constant 0 : index
    %c0_17 = arith.constant 0 : index
    %21 = vector.load %arg9[%c0_16, %c0_17] : memref<16x128xf32, #tpu.memory_space<vmem>>, vector<16x128xf32>
    tpu.vector_store %arg9[%c0_16, %c0_17], %20 {strides = array<i32>} : memref<16x128xf32, #tpu.memory_space<vmem>>, vector<16x128xf32>,
    %cst_18 = arith.constant dense<0.000000e+00> : vector<16x128xf32>
    %22 = tpu.matmul %8, %10, %cst_18 {dimension_numbers = #tpu.dot_dimension_numbers<[1], [0], [0], [1], [0, 0, 1, 1], [], []>} : vector<16x4xf32>, vector<4x128xf32>, vector<16x128xf32> -> vector<16x128xf32>
    %23 = arith.mulf %22, %11 : vector<16x128xf32>
    %24 = arith.truncf %23 : vector<16x128xf32> to vector<16x128xbf16>
    %25 = arith.mulf %22, %12 : vector<16x128xf32>
    %26 = arith.truncf %25 : vector<16x128xf32> to vector<16x128xbf16>
    %cst_19 = arith.constant dense<0.000000e+00> : vector<16x20xf32>
    %27 = tpu.matmul %24, %7, %cst_19 {dimension_numbers = #tpu.dot_dimension_numbers<[1], [0], [0], [1], [0, 0, 1, 1], [], []>} : vector<16x128xbf16>, vector<128x20xbf16>, vector<16x20xf32> -> vector<16x20xf32>
    %cst_20 = arith.constant dense<0.000000e+00> : vector<16x20xf32>
    %28 = tpu.matmul %26, %5, %cst_20 {dimension_numbers = #tpu.dot_dimension_numbers<[1], [0], [0], [1], [0, 0, 1, 1], [], []>} : vector<16x128xbf16>, vector<128x20xbf16>, vector<16x20xf32> -> vector<16x20xf32>
    %29 = arith.addf %27, %28 : vector<16x20xf32>
    %c0_21 = arith.constant 0 : index
    %c0_22 = arith.constant 0 : index
    %c0_23 = arith.constant 0 : index
    %30 = vector.load %arg8[%c0_21, %c0_22, %c0_23] : memref<1x16x20xf32, #tpu.memory_space<vmem>>, vector<1x16x20xf32>
    %31 = vector.shape_cast %29 : vector<16x20xf32> to vector<1x16x20xf32>
    %32 = arith.addf %30, %31 : vector<1x16x20xf32>
    %c0_24 = arith.constant 0 : index
    %c0_25 = arith.constant 0 : index
    %c0_26 = arith.constant 0 : index
    %33 = vector.load %arg8[%c0_24, %c0_25, %c0_26] : memref<1x16x20xf32, #tpu.memory_space<vmem>>, vector<1x16x20xf32>
    tpu.vector_store %arg8[%c0_24, %c0_25, %c0_26], %32 {strides = array<i32>} : memref<1x16x20xf32, #tpu.memory_space<vmem>>, vector<1x16x20xf32>,
    return
  }
  func.func @transform_0(%arg0: i32, %arg1: i32) -> (i32, i32) {
    %c0_i32 = arith.constant 0 : i32
    %c0_i32_0 = arith.constant 0 : i32
    %c0_i32_1 = arith.constant 0 : i32
    return %c0_i32, %c0_i32_0 : i32, i32
  }
  func.func @transform_1(%arg0: i32, %arg1: i32) -> (i32, i32) {
    %c0_i32 = arith.constant 0 : i32
    %c0_i32_0 = arith.constant 0 : i32
    %c0_i32_1 = arith.constant 0 : i32
    return %c0_i32, %c0_i32_0 : i32, i32
  }
  func.func @transform_2(%arg0: i32, %arg1: i32) -> (i32, i32) {
    %c0_i32 = arith.constant 0 : i32
    %c0_i32_0 = arith.constant 0 : i32
    %c0_i32_1 = arith.constant 0 : i32
    return %c0_i32, %c0_i32_0 : i32, i32
  }
  func.func @transform_3(%arg0: i32, %arg1: i32) -> (i32, i32) {
    %c1_i32 = arith.constant 1 : i32
    %0 = arith.muli %arg0, %c1_i32 : i32
    %1 = arith.addi %0, %arg1 : i32
    %c0_i32 = arith.constant 0 : i32
    %c0_i32_0 = arith.constant 0 : i32
    return %1, %c0_i32 : i32, i32
  }
  func.func @transform_4(%arg0: i32, %arg1: i32) -> (i32, i32) {
    %c1_i32 = arith.constant 1 : i32
    %0 = arith.muli %arg0, %c1_i32 : i32
    %1 = arith.addi %0, %arg1 : i32
    %c0_i32 = arith.constant 0 : i32
    %c0_i32_0 = arith.constant 0 : i32
    return %1, %c0_i32 : i32, i32
  }
  func.func @transform_5(%arg0: i32, %arg1: i32) -> (i32, i32) {
    %c1_i32 = arith.constant 1 : i32
    %0 = arith.muli %arg0, %c1_i32 : i32
    %1 = arith.addi %0, %arg1 : i32
    %c0_i32 = arith.constant 0 : i32
    %c0_i32_0 = arith.constant 0 : i32
    return %c0_i32, %1 : i32, i32
  }
  func.func @transform_6(%arg0: i32, %arg1: i32) -> (i32, i32, i32) {
    %c0_i32 = arith.constant 0 : i32
    %c0_i32_0 = arith.constant 0 : i32
    %c0_i32_1 = arith.constant 0 : i32
    return %arg0, %c0_i32, %c0_i32_0 : i32, i32, i32
  }
  func.func @transform_7(%arg0: i32, %arg1: i32) -> (i32, i32) {
    %c1_i32 = arith.constant 1 : i32
    %0 = arith.muli %arg0, %c1_i32 : i32
    %1 = arith.addi %0, %arg1 : i32
    %c0_i32 = arith.constant 0 : i32
    %c0_i32_0 = arith.constant 0 : i32
    return %c0_i32, %1 : i32, i32
  }
}

</mosaic_0001>

<llo_original>
// kernel: tpu_custom_call.1
$region0: #{tpu_custom_call.1}
  #allocation0 [shape = 'u32[]', space=smem, size = 0x4, offset = 0x4, fixed_abs, tag = 'smem constant byte address 0x4 - core index']
  #allocation1 [shape = 'u32[144,128]{1,0:T(1,128)}', space=vmem, size = 0x12000, scoped, tag = 'internal scratch']
  %s0 = inlined_call_operand.vmem [shape: bf16[16,20], index: 0, kind: input, shape index: {}]
  %s1 = inlined_call_operand.vmem [shape: f32[16,4], index: 1, kind: input, shape index: {}]
  %s2 = inlined_call_operand.vmem [shape: f32[4,16], index: 2, kind: input, shape index: {}]
  %s3 = inlined_call_operand.vmem [shape: s8[256,20], index: 3, kind: input, shape index: {}]
  %s4 = inlined_call_operand.vmem [shape: s8[256,20], index: 4, kind: input, shape index: {}]
  %s5 = inlined_call_operand.vmem [shape: f32[4,256], index: 5, kind: input, shape index: {}]
  %s6 = inlined_call_operand.hbm [shape: f32[2,16,20], index: 6, kind: output, shape index: {0}]
  %s7 = inlined_call_operand.hbm [shape: f32[16,256], index: 7, kind: output, shape index: {1}]
  %8 = xla_tuple %s6, %s7
  %s9 = sld [smem:[#allocation0]]
  $region69: #{tpu_custom_call.1} parent=0
    _
  %s11 = ssub.s32 1, %s9
  %s12 = scalar_select 0, %s11, %s9
  $region1: #{tpu_custom_call.1} parent=0
    #allocation2 [shape = 'u8[16384]{0}', space=vmem, size = 0x4000, scoped, tag = 'output window, operand 0']
    #allocation3 [shape = 's32[2]{0}', space=sflag, size = 0x8, scoped, tag = 'scoped memory for tpu_custom_call.1']
    #allocation4 [shape = 'u8[16384]{0}', space=vmem, size = 0x4000, scoped, tag = 'output window, operand 1']
    #allocation5 [shape = 's32[2]{0}', space=sflag, size = 0x8, scoped, tag = 'scoped memory for tpu_custom_call.1']
    %13 = vsyncpa [#allocation3], 0
    %s14 = scalar_lea.sflag [#allocation3], 1
    %15 = vsyncpa %s14, 0
    %16 = vsyncpa [#allocation5], 0
    %s17 = scalar_lea.sflag [#allocation5], 1
    %18 = vsyncpa %s17, 0
    loop: start=0, step=1, limit=4
    $region2: #{tpu_custom_call.1} parent=1 // loop_pre_header
      _
    $region3: #{tpu_custom_call.1} parent=1 // loop_header
      %s20 = sphi 0, %s24
      %p21 = scmp.ge.s32.totalorder %s20, 4
      %s27 = sphi 0, %s39
      %s28 = sphi 0, %s35
      %s29 = sphi 0, %s27
      %s30 = sphi 0, %s28
      %s31 = sphi 0, %s29
      %s32 = sphi 0, %s30
      %s40 = sphi 0, %s40
      %s42 = sphi 0, %s40
      %s43 = sphi 0, %s42
      %s57 = sphi 0, %s43
      %s61 = sphi 0, %s61
      %s63 = sphi 0, %s61
      %s64 = sphi 0, %s63
      %s78 = sphi 0, %s64
      %s82 = sphi 0, %s82
      %s84 = sphi 0, %s82
      %s85 = sphi 0, %s84
      %s99 = sphi 0, %s85
      %s107 = sphi 0, %s109
      %s110 = sphi 0, %s107
      %s111 = sphi 0, %s110
      %s127 = sphi 0, %s111
      %s135 = sphi 0, %s137
      %s138 = sphi 0, %s135
      %s139 = sphi 0, %s138
      %s155 = sphi 0, %s139
      %s163 = sphi 0, %s165
      %s166 = sphi 0, %s163
      %s167 = sphi 0, %s166
      %s183 = sphi 0, %s167
      %s189 = sphi 0, %s191
      %s192 = sphi 0, %s189
      %s193 = sphi 0, %s192
      %s209 = sphi 0, %s193
      %s217 = sphi 0, %s219
      %s220 = sphi 0, %s217
      %s221 = sphi 0, %s220
      %s237 = sphi 0, %s221
    $region4: #{tpu_custom_call.1} parent=1 // loop_header_branch
      %23 = sbr.rel (%p21) target = $region8
    $region5: #{tpu_custom_call.1} parent=1 // loop_body
      %s25 = ssub.s32 %s20, 1
      %s26 = ssub.s32 %s20, 2
      %s33 = sadd.s32 1, %s28
      %p34 = scmp.ge.s32.totalorder %s33, 1
      %s35 = scalar_select %p34, 0, %s33
      %s36 = sadd.s32 1, %s27
      %s37 = scalar_select %p34, %s36, %s27
      %p38 = scmp.ge.s32.totalorder %s37, 2
      %s39 = scalar_select %p38, 0, %s37
      %s41 = sadd.s32 %s40, 1
      %p44 = scmp.eq.s32.totalorder %s20, 1
      %p45 = scmp.ne.s32.totalorder %s40, %s42
      %p46 = scmp.eq.s32.totalorder %s20, 0
      %p47 = por %p45, %p46
      %p48 = scmp.ne.s32.totalorder %s40, %s42
      %p49 = scmp.eq.s32.totalorder %s25, 1
      %p50 = por %p48, %p49
      %p51 = scmp.ne.s32.totalorder %s42, %s43
      %p52 = scmp.eq.s32.totalorder %s25, 0
      %p53 = por %p51, %p52
      %p54 = scmp.ne.s32.totalorder %s42, %s43
      %p55 = scmp.eq.s32.totalorder %s26, 1
      %p56 = por %p54, %p55
      %p58 = scmp.ne.s32.totalorder %s43, %s57
      %p59 = scmp.eq.s32.totalorder %s26, 0
      %p60 = por %p58, %p59
      %s62 = sadd.s32 %s61, 1
      %p65 = scmp.eq.s32.totalorder %s20, 1
      %p66 = scmp.ne.s32.totalorder %s61, %s63
      %p67 = scmp.eq.s32.totalorder %s20, 0
      %p68 = por %p66, %p67
      %p69 = scmp.ne.s32.totalorder %s61, %s63
      %p70 = scmp.eq.s32.totalorder %s25, 1
      %p71 = por %p69, %p70
      %p72 = scmp.ne.s32.totalorder %s63, %s64
      %p73 = scmp.eq.s32.totalorder %s25, 0
      %p74 = por %p72, %p73
      %p75 = scmp.ne.s32.totalorder %s63, %s64
      %p76 = scmp.eq.s32.totalorder %s26, 1
      %p77 = por %p75, %p76
      %p79 = scmp.ne.s32.totalorder %s64, %s78
      %p80 = scmp.eq.s32.totalorder %s26, 0
      %p81 = por %p79, %p80
      %s83 = sadd.s32 %s82, 1
      %p86 = scmp.eq.s32.totalorder %s20, 1
      %p87 = scmp.ne.s32.totalorder %s82, %s84
      %p88 = scmp.eq.s32.totalorder %s20, 0
      %p89 = por %p87, %p88
      %p90 = scmp.ne.s32.totalorder %s82, %s84
      %p91 = scmp.eq.s32.totalorder %s25, 1
      %p92 = por %p90, %p91
      %p93 = scmp.ne.s32.totalorder %s84, %s85
      %p94 = scmp.eq.s32.totalorder %s25, 0
      %p95 = por %p93, %p94
      %p96 = scmp.ne.s32.totalorder %s84, %s85
      %p97 = scmp.eq.s32.totalorder %s26, 1
      %p98 = por %p96, %p97
      %p100 = scmp.ne.s32.totalorder %s85, %s99
      %p101 = scmp.eq.s32.totalorder %s26, 0
      %p102 = por %p100, %p101
      %s103 = sadd.s32 %s27, %s28
      %s104 = sadd.s32 %s39, %s35
      %s105 = ssub.s32 %s103, %s104
      %p106 = scmp.eq.s32.totalorder %s105, 0
      %s108 = sadd.s32 %s107, 1
      %s109 = scalar_select %p106, %s107, %s108
      %p112 = pneg %p106
      %p113 = scmp.eq.s32.totalorder %s20, 1
      %p114 = por %p112, %p113
      %p115 = scmp.ne.s32.totalorder %s107, %s110
      %p116 = scmp.eq.s32.totalorder %s20, 0
      %p117 = por %p115, %p116
      %p118 = scmp.ne.s32.totalorder %s107, %s110
      %p119 = scmp.eq.s32.totalorder %s25, 1
      %p120 = por %p118, %p119
      %p121 = scmp.ne.s32.totalorder %s110, %s111
      %p122 = scmp.eq.s32.totalorder %s25, 0
      %p123 = por %p121, %p122
      %p124 = scmp.ne.s32.totalorder %s110, %s111
      %p125 = scmp.eq.s32.totalorder %s26, 1
      %p126 = por %p124, %p125
      %p128 = scmp.ne.s32.totalorder %s111, %s127
      %p129 = scmp.eq.s32.totalorder %s26, 0
      %p130 = por %p128, %p129
      %s131 = sadd.s32 %s27, %s28
      %s132 = sadd.s32 %s39, %s35
      %s133 = ssub.s32 %s131, %s132
      %p134 = scmp.eq.s32.totalorder %s133, 0
      %s136 = sadd.s32 %s135, 1
      %s137 = scalar_select %p134, %s135, %s136
      %p140 = pneg %p134
      %p141 = scmp.eq.s32.totalorder %s20, 1
      %p142 = por %p140, %p141
      %p143 = scmp.ne.s32.totalorder %s135, %s138
      %p144 = scmp.eq.s32.totalorder %s20, 0
      %p145 = por %p143, %p144
      %p146 = scmp.ne.s32.totalorder %s135, %s138
      %p147 = scmp.eq.s32.totalorder %s25, 1
      %p148 = por %p146, %p147
      %p149 = scmp.ne.s32.totalorder %s138, %s139
      %p150 = scmp.eq.s32.totalorder %s25, 0
      %p151 = por %p149, %p150
      %p152 = scmp.ne.s32.totalorder %s138, %s139
      %p153 = scmp.eq.s32.totalorder %s26, 1
      %p154 = por %p152, %p153
      %p156 = scmp.ne.s32.totalorder %s139, %s155
      %p157 = scmp.eq.s32.totalorder %s26, 0
      %p158 = por %p156, %p157
      %s159 = sadd.s32 %s27, %s28
      %s160 = sadd.s32 %s39, %s35
      %s161 = ssub.s32 %s159, %s160
      %p162 = scmp.eq.s32.totalorder %s161, 0
      %s164 = sadd.s32 %s163, 1
      %s165 = scalar_select %p162, %s163, %s164
      %p168 = pneg %p162
      %p169 = scmp.eq.s32.totalorder %s20, 1
      %p170 = por %p168, %p169
      %p171 = scmp.ne.s32.totalorder %s163, %s166
      %p172 = scmp.eq.s32.totalorder %s20, 0
      %p173 = por %p171, %p172
      %p174 = scmp.ne.s32.totalorder %s163, %s166
      %p175 = scmp.eq.s32.totalorder %s25, 1
      %p176 = por %p174, %p175
      %p177 = scmp.ne.s32.totalorder %s166, %s167
      %p178 = scmp.eq.s32.totalorder %s25, 0
      %p179 = por %p177, %p178
      %p180 = scmp.ne.s32.totalorder %s166, %s167
      %p181 = scmp.eq.s32.totalorder %s26, 1
      %p182 = por %p180, %p181
      %p184 = scmp.ne.s32.totalorder %s167, %s183
      %p185 = scmp.eq.s32.totalorder %s26, 0
      %p186 = por %p184, %p185
      %s187 = ssub.s32 %s27, %s39
      %p188 = scmp.eq.s32.totalorder %s187, 0
      %s190 = sadd.s32 %s189, 1
      %s191 = scalar_select %p188, %s189, %s190
      %p194 = pneg %p188
      %p195 = scmp.eq.s32.totalorder %s20, 1
      %p196 = por %p194, %p195
      %p197 = scmp.ne.s32.totalorder %s189, %s192
      %p198 = scmp.eq.s32.totalorder %s20, 0
      %p199 = por %p197, %p198
      %p200 = scmp.ne.s32.totalorder %s189, %s192
      %p201 = scmp.eq.s32.totalorder %s25, 1
      %p202 = por %p200, %p201
      %p203 = scmp.ne.s32.totalorder %s192, %s193
      %p204 = scmp.eq.s32.totalorder %s25, 0
      %p205 = por %p203, %p204
      %p206 = scmp.ne.s32.totalorder %s192, %s193
      %p207 = scmp.eq.s32.totalorder %s26, 1
      %p208 = por %p206, %p207
      %p210 = scmp.ne.s32.totalorder %s193, %s209
      %p211 = scmp.eq.s32.totalorder %s26, 0
      %p212 = por %p210, %p211
      %s213 = sadd.s32 %s27, %s28
      %s214 = sadd.s32 %s39, %s35
      %s215 = ssub.s32 %s213, %s214
      %p216 = scmp.eq.s32.totalorder %s215, 0
      %s218 = sadd.s32 %s217, 1
      %s219 = scalar_select %p216, %s217, %s218
      %p222 = pneg %p216
      %p223 = scmp.eq.s32.totalorder %s20, 1
      %p224 = por %p222, %p223
      %p225 = scmp.ne.s32.totalorder %s217, %s220
      %p226 = scmp.eq.s32.totalorder %s20, 0
      %p227 = por %p225, %p226
      %p228 = scmp.ne.s32.totalorder %s217, %s220
      %p229 = scmp.eq.s32.totalorder %s25, 1
      %p230 = por %p228, %p229
      %p231 = scmp.ne.s32.totalorder %s220, %s221
      %p232 = scmp.eq.s32.totalorder %s25, 0
      %p233 = por %p231, %p232
      %p234 = scmp.ne.s32.totalorder %s220, %s221
      %p235 = scmp.eq.s32.totalorder %s26, 1
      %p236 = por %p234, %p235
      %p238 = scmp.ne.s32.totalorder %s221, %s237
      %p239 = scmp.eq.s32.totalorder %s26, 0
      %p240 = por %p238, %p239
      %p241 = scmp.le.s32.totalorder 1, %s20
      %p242 = scmp.lt.s32.totalorder %s20, 3
      %p243 = pnand %p241, %p242
      %p244 = pneg %p243
      // Predicated region
      $region9: #{tpu_custom_call.1} parent=5 // pred_check
        _
      $region10: #{tpu_custom_call.1} parent=5 // pred_check_branch
        %246 = sbr.rel (%p243) target = $region12
      $region11: #{tpu_custom_call.1} parent=5 // pred_region
        %s247 = ssub.s32 %s20, 1
        // Predicated region
        $region13: #{tpu_custom_call.1} parent=11 // pred_check
          %p248 = pneg %p53
        $region14: #{tpu_custom_call.1} parent=11 // pred_check_branch
          %250 = sbr.rel (%p248) target = $region16
        $region15: #{tpu_custom_call.1} parent=11 // pred_region
          _
        $region16: #{tpu_custom_call.1} parent=11 // pred_fallthru
          _
        // Predicated region
        $region17: #{tpu_custom_call.1} parent=11 // pred_check
          %p251 = pneg %p74
        $region18: #{tpu_custom_call.1} parent=11 // pred_check_branch
          %253 = sbr.rel (%p251) target = $region20
        $region19: #{tpu_custom_call.1} parent=11 // pred_region
          _
        $region20: #{tpu_custom_call.1} parent=11 // pred_fallthru
          _
        // Predicated region
        $region21: #{tpu_custom_call.1} parent=11 // pred_check
          %p254 = pneg %p95
        $region22: #{tpu_custom_call.1} parent=11 // pred_check_branch
          %256 = sbr.rel (%p254) target = $region24
        $region23: #{tpu_custom_call.1} parent=11 // pred_region
          _
        $region24: #{tpu_custom_call.1} parent=11 // pred_fallthru
          _
      $region12: #{tpu_custom_call.1} parent=5 // pred_fallthru
        _
      %p257 = scmp.lt.s32.totalorder %s20, 2
      // Predicated region
      $region25: #{tpu_custom_call.1} parent=5 // pred_check
        %p258 = pneg %p257
      $region26: #{tpu_custom_call.1} parent=5 // pred_check_branch
        %260 = sbr.rel (%p258) target = $region28
      $region27: #{tpu_custom_call.1} parent=5 // pred_region
        // Predicated region
        $region29: #{tpu_custom_call.1} parent=27 // pred_check
          %p261 = pneg %p117
        $region30: #{tpu_custom_call.1} parent=27 // pred_check_branch
          %263 = sbr.rel (%p261) target = $region32
        $region31: #{tpu_custom_call.1} parent=27 // pred_region
          %s264 = sadd.s32 %s27, %s28
          %s265 = smul.u32 4, %s264
          %p266 = scmp.lt.s32.totalorder %s265, 7
          %s267 = scalar_select %p266, %s265, 7
          %s268 = smul.addr %s267, 8
          %s269 = scalar_lea.vmem %s3, %s268
          %s270 = sadd.s32 %s27, %s28
          %s271 = smul.u32 4, %s270
        $region32: #{tpu_custom_call.1} parent=27 // pred_fallthru
          _
        // Predicated region
        $region33: #{tpu_custom_call.1} parent=27 // pred_check
          %p272 = pneg %p145
        $region34: #{tpu_custom_call.1} parent=27 // pred_check_branch
          %274 = sbr.rel (%p272) target = $region36
        $region35: #{tpu_custom_call.1} parent=27 // pred_region
          %s275 = sadd.s32 %s27, %s28
          %s276 = smul.u32 4, %s275
          %p277 = scmp.lt.s32.totalorder %s276, 7
          %s278 = scalar_select %p277, %s276, 7
          %s279 = smul.addr %s278, 8
          %s280 = scalar_lea.vmem %s4, %s279
          %s281 = sadd.s32 %s27, %s28
          %s282 = smul.u32 4, %s281
        $region36: #{tpu_custom_call.1} parent=27 // pred_fallthru
          _
        // Predicated region
        $region37: #{tpu_custom_call.1} parent=27 // pred_check
          %p283 = pneg %p173
        $region38: #{tpu_custom_call.1} parent=27 // pred_check_branch
          %285 = sbr.rel (%p283) target = $region40
        $region39: #{tpu_custom_call.1} parent=27 // pred_region
          %s286 = sadd.s32 %s27, %s28
          %p287 = scmp.lt.s32.totalorder %s286, 1
          %s288 = scalar_select %p287, %s286, 1
          %s289 = smul.addr %s288, 4
          %s290 = scalar_lea.vmem %s5, %s289
          %s291 = sadd.s32 %s27, %s28
        $region40: #{tpu_custom_call.1} parent=27 // pred_fallthru
          _
      $region28: #{tpu_custom_call.1} parent=5 // pred_fallthru
        _
      %p292 = scmp.le.s32.totalorder 1, %s20
      %p293 = scmp.lt.s32.totalorder %s20, 3
      %p294 = pnand %p292, %p293
      %p295 = pneg %p294
      // Predicated region
      $region41: #{tpu_custom_call.1} parent=5 // pred_check
        _
      $region42: #{tpu_custom_call.1} parent=5 // pred_check_branch
        %297 = sbr.rel (%p294) target = $region44
      $region43: #{tpu_custom_call.1} parent=5 // pred_region
        %s298 = ssub.s32 %s20, 1
        %p299 = pneg %p53
        %p300 = pneg %p50
        %p301 = pneg %p74
        %p302 = pneg %p71
        %p303 = pneg %p95
        %p304 = pneg %p92
        %s305 = sadd.s32 %s29, %s30
        %s306 = smul.u32 4, %s305
        %p307 = scmp.lt.s32.totalorder %s306, 7
        %s308 = scalar_select %p307, %s306, 7
        %s309 = smul.addr %s308, 8
        %s310 = scalar_lea.vmem %s3, %s309
        %p311 = pneg %p123
        %p312 = pneg %p120
        %s313 = sadd.s32 %s29, %s30
        %s314 = smul.u32 4, %s313
        %p315 = scmp.lt.s32.totalorder %s314, 7
        %s316 = scalar_select %p315, %s314, 7
        %s317 = smul.addr %s316, 8
        %s318 = scalar_lea.vmem %s4, %s317
        %p319 = pneg %p151
        %p320 = pneg %p148
        %s321 = sadd.s32 %s29, %s30
        %p322 = scmp.lt.s32.totalorder %s321, 1
        %s323 = scalar_select %p322, %s321, 1
        %s324 = smul.addr %s323, 4
        %s325 = scalar_lea.vmem %s5, %s324
        %p326 = pneg %p179
        %p327 = pneg %p176
        %p328 = pneg %p205
        %p329 = pneg %p202
        %s330 = sand.u32 %s192, 1
        %s331 = scalar_lea.sflag [#allocation3], %s330
        %s332 = sand.u32 %s192, 1
        %s333 = smul.addr %s332, 16
        %s334 = scalar_lea.vmem [#allocation2], %s333
        %p335 = pneg %p233
        %p336 = pneg %p230
        %s337 = sand.u32 %s220, 1
        %s338 = scalar_lea.sflag [#allocation5], %s337
        %s339 = sand.u32 %s220, 1
        %s340 = smul.addr %s339, 16
        %s341 = scalar_lea.vmem [#allocation4], %s340
        %s342 = sadd.s32 %s29, %s30
        %s343 = smul.u32 4, %s342
        %p344 = scmp.lt.s32.totalorder %s343, 7
        %s345 = scalar_select %p344, %s343, 7
        %s346 = smul.addr %s345, 8
        %s347 = scalar_lea.vmem %s3, %s346
        %s348 = sadd.s32 %s29, %s30
        %s349 = smul.u32 4, %s348
        %s350 = sadd.s32 %s29, %s30
        %s351 = smul.u32 4, %s350
        %p352 = scmp.lt.s32.totalorder %s351, 7
        %s353 = scalar_select %p352, %s351, 7
        %s354 = smul.addr %s353, 8
        %s355 = scalar_lea.vmem %s4, %s354
        %s356 = sadd.s32 %s29, %s30
        %s357 = smul.u32 4, %s356
        %s358 = sadd.s32 %s29, %s30
        %p359 = scmp.lt.s32.totalorder %s358, 1
        %s360 = scalar_select %p359, %s358, 1
        %s361 = smul.addr %s360, 4
        %s362 = scalar_lea.vmem %s5, %s361
        %s363 = sadd.s32 %s29, %s30
        %s364 = sadd.s32 %s29, %s30
        %p366 = scmp.eq.s32.totalorder %s30, 0
        // Predicated region
        $region45: #{tpu_custom_call.1} parent=43 // pred_check
          %p367 = pneg %p366
        $region46: #{tpu_custom_call.1} parent=43 // pred_check_branch
          %369 = sbr.rel (%p367) target = $region48
        $region47: #{tpu_custom_call.1} parent=43 // pred_region
          %vm370 = vcmask 162816
          %371 = vst.msk [vmem:[%s334] sm:$0xff] %vm370, 0.0
          %372 = vst.msk [vmem:[%s334 + $0x8] sm:$0xff] %vm370, 0.0
        $region48: #{tpu_custom_call.1} parent=43 // pred_fallthru
          _
        %v373 = vld [vmem:[%s0] sm:$0xf]
        %v374 = vld [vmem:[%s0 + $0x4] sm:$0xf]
        %v375 = vld [vmem:[%s347] sm:$0xff]
        %v376 = vld [vmem:[%s347 + $0x8] sm:$0xff]
        %v377 = vld [vmem:[%s347 + $0x10] sm:$0xff]
        %v378 = vld [vmem:[%s347 + $0x18] sm:$0xff]
        %v379 = vunpack.c.l.s8.bf16 %v375
        %v380 = vunpack.c.h.s8.bf16 %v375
        %v381 = vunpack.c.l.s8.bf16 %v376
        %v382 = vunpack.c.h.s8.bf16 %v376
        %v383 = vunpack.c.l.s8.bf16 %v377
        %v384 = vunpack.c.h.s8.bf16 %v377
        %v385 = vunpack.c.l.s8.bf16 %v378
        %v386 = vunpack.c.h.s8.bf16 %v378
        %v387 = vld [vmem:[%s355] sm:$0xff]
        %v388 = vld [vmem:[%s355 + $0x8] sm:$0xff]
        %v389 = vld [vmem:[%s355 + $0x10] sm:$0xff]
        %v390 = vld [vmem:[%s355 + $0x18] sm:$0xff]
        %v391 = vunpack.c.l.s8.bf16 %v387
        %v392 = vunpack.c.h.s8.bf16 %v387
        %v393 = vunpack.c.l.s8.bf16 %v388
        %v394 = vunpack.c.h.s8.bf16 %v388
        %v395 = vunpack.c.l.s8.bf16 %v389
        %v396 = vunpack.c.h.s8.bf16 %v389
        %v397 = vunpack.c.l.s8.bf16 %v390
        %v398 = vunpack.c.h.s8.bf16 %v390
        %v399 = vld [vmem:[%s1] sm:$0xff]
        %v400 = vld [vmem:[%s1 + $0x8] sm:$0xff]
        %v401 = vld [vmem:[%s2] sm:$0xf]
        %v402 = vld [vmem:[%s362] sm:$0xf]
        %v405 = vunpack.c.l.b16 %v373
        %v406 = vunpack.c.l.b16 %v374
        %v407 = vpack.c.b16 %v406, %v405
        %vm408 = vcmask 162816
        %v410 = vsel %vm408, %v407, 0
        %v413 = vsel %vm408, %v379, 0
        %v416 = vsel %vm408, %v380, 0
        %v419 = vsel %vm408, %v381, 0
        %v422 = vsel %vm408, %v382, 0
        %v425 = vsel %vm408, %v383, 0
        %v428 = vsel %vm408, %v384, 0
        %v431 = vsel %vm408, %v385, 0
        %v434 = vsel %vm408, %v386, 0
        %436 = vmatprep.subr.bf16.mxu0 0
        %437 = vmatpush1.bf16.xpose.msra.mxu0 %v413
        %438 = vmatprep.subr.bf16.mxu0 0
        %439 = vmatpush1.bf16.xpose.msra.mxu0 %v416
        %440 = vmatprep.subr.bf16.mxu0 0
        %441 = vmatpush1.bf16.xpose.msra.mxu0 %v419
        %442 = vmatprep.subr.bf16.mxu0 0
        %443 = vmatpush1.bf16.xpose.msra.mxu0 %v422
        %444 = vmatprep.subr.bf16.mxu0 0
        %445 = vmatpush1.bf16.xpose.msra.mxu0 %v425
        %446 = vmatprep.subr.bf16.mxu0 0
        %447 = vmatpush1.bf16.xpose.msra.mxu0 %v428
        %448 = vmatprep.subr.bf16.mxu0 0
        %449 = vmatpush1.bf16.xpose.msra.mxu0 %v431
        %450 = vmatprep.subr.bf16.mxu0 0
        %451 = vmatpush1.bf16.xpose.msra.mxu0 %v434
        %452 = vmatprep.subr.bf16.mxu0 0
        %453 = vmatpush1.bf16.xpose.msra.mxu0 0
        %454 = vmatprep.subr.bf16.mxu0 0
        %455 = vmatpush1.bf16.xpose.msra.mxu0 0
        %456 = vmatprep.subr.bf16.mxu0 0
        %457 = vmatpush1.bf16.xpose.msra.mxu0 0
        %458 = vmatprep.subr.bf16.mxu0 0
        %459 = vmatpush1.bf16.xpose.msra.mxu0 0
        %460 = vmatprep.subr.bf16.mxu0 0
        %461 = vmatpush1.bf16.xpose.msra.mxu0 0
        %462 = vmatprep.subr.bf16.mxu0 0
        %463 = vmatpush1.bf16.xpose.msra.mxu0 0
        %464 = vmatprep.subr.bf16.mxu0 0
        %465 = vmatpush1.bf16.xpose.msra.mxu0 0
        %466 = vmatprep.subr.bf16.mxu0 0
        %467 = vmatpush1.bf16.xpose.msra.mxu0 0
        %468 = vmatprep.mubr.bf16.mxu0 0
        %469 = vmatmul.mubr.bf16.gmra.mrb[0].mxu0 %v410
        %v470 = vpop.f32.mrb[0].mxu0
        %v471 = vadd.f32 0.0, %v470
        %v472 = vpop.f32.mrb[0].mxu0
        %v473 = vpop.f32.mrb[0].mxu0
        %v474 = vadd.f32 0.0, %v473
        %v475 = vpop.f32.mrb[0].mxu0
        %476 = vdwg.mxu0
        %v478 = vsel %vm408, %v391, 0
        %v481 = vsel %vm408, %v392, 0
        %v484 = vsel %vm408, %v393, 0
        %v487 = vsel %vm408, %v394, 0
        %v490 = vsel %vm408, %v395, 0
        %v493 = vsel %vm408, %v396, 0
        %v496 = vsel %vm408, %v397, 0
        %v499 = vsel %vm408, %v398, 0
        %501 = vmatprep.subr.bf16.mxu0 0
        %502 = vmatpush1.bf16.xpose.msra.mxu0 %v478
        %503 = vmatprep.subr.bf16.mxu0 0
        %504 = vmatpush1.bf16.xpose.msra.mxu0 %v481
        %505 = vmatprep.subr.bf16.mxu0 0
        %506 = vmatpush1.bf16.xpose.msra.mxu0 %v484
        %507 = vmatprep.subr.bf16.mxu0 0
        %508 = vmatpush1.bf16.xpose.msra.mxu0 %v487
        %509 = vmatprep.subr.bf16.mxu0 0
        %510 = vmatpush1.bf16.xpose.msra.mxu0 %v490
        %511 = vmatprep.subr.bf16.mxu0 0
        %512 = vmatpush1.bf16.xpose.msra.mxu0 %v493
        %513 = vmatprep.subr.bf16.mxu0 0
        %514 = vmatpush1.bf16.xpose.msra.mxu0 %v496
        %515 = vmatprep.subr.bf16.mxu0 0
        %516 = vmatpush1.bf16.xpose.msra.mxu0 %v499
        %517 = vmatprep.subr.bf16.mxu0 0
        %518 = vmatpush1.bf16.xpose.msra.mxu0 0
        %519 = vmatprep.subr.bf16.mxu0 0
        %520 = vmatpush1.bf16.xpose.msra.mxu0 0
        %521 = vmatprep.subr.bf16.mxu0 0
        %522 = vmatpush1.bf16.xpose.msra.mxu0 0
        %523 = vmatprep.subr.bf16.mxu0 0
        %524 = vmatpush1.bf16.xpose.msra.mxu0 0
        %525 = vmatprep.subr.bf16.mxu0 0
        %526 = vmatpush1.bf16.xpose.msra.mxu0 0
        %527 = vmatprep.subr.bf16.mxu0 0
        %528 = vmatpush1.bf16.xpose.msra.mxu0 0
        %529 = vmatprep.subr.bf16.mxu0 0
        %530 = vmatpush1.bf16.xpose.msra.mxu0 0
        %531 = vmatprep.subr.bf16.mxu0 0
        %532 = vmatpush1.bf16.xpose.msra.mxu0 0
        %533 = vmatprep.mubr.bf16.mxu0 0
        %534 = vmatmul.mubr.bf16.gmra.mrb[0].mxu0 %v410
        %v535 = vpop.f32.mrb[0].mxu0
        %v536 = vadd.f32 0.0, %v535
        %v537 = vpop.f32.mrb[0].mxu0
        %v538 = vpop.f32.mrb[0].mxu0
        %v539 = vadd.f32 0.0, %v538
        %v540 = vpop.f32.mrb[0].mxu0
        %541 = vdwg.mxu0
        %v542 = vmul.f32 %v536, %v536
        %v543 = vmul.f32 %v539, %v539
        %vm544 = vcmask 130048
        %v546 = vsel %vm544, %v401, 0
        %548 = vmatprep.subr.mxu0 0.0
        %549 = vmatpush1.msra.mxu0 %v542
        %550 = vmatprep.subr.mxu0 0.0
        %551 = vmatpush1.msra.mxu0 %v543
        %552 = vmatprep.subr.mxu0 0.0
        %553 = vmatpush1.msra.mxu0 0.0
        %554 = vmatprep.subr.mxu0 0.0
        %555 = vmatpush1.msra.mxu0 0.0
        %556 = vmatprep.subr.mxu0 0.0
        %557 = vmatpush1.msra.mxu0 0.0
        %558 = vmatprep.subr.mxu0 0.0
        %559 = vmatpush1.msra.mxu0 0.0
        %560 = vmatprep.subr.mxu0 0.0
        %561 = vmatpush1.msra.mxu0 0.0
        %562 = vmatprep.subr.mxu0 0.0
        %563 = vmatpush1.msra.mxu0 0.0
        %564 = vmatprep.subr.mxu0 0.0
        %565 = vmatpush1.msra.mxu0 0.0
        %566 = vmatprep.subr.mxu0 0.0
        %567 = vmatpush1.msra.mxu0 0.0
        %568 = vmatprep.subr.mxu0 0.0
        %569 = vmatpush1.msra.mxu0 0.0
        %570 = vmatprep.subr.mxu0 0.0
        %571 = vmatpush1.msra.mxu0 0.0
        %572 = vmatprep.subr.mxu0 0.0
        %573 = vmatpush1.msra.mxu0 0.0
        %574 = vmatprep.subr.mxu0 0.0
        %575 = vmatpush1.msra.mxu0 0.0
        %576 = vmatprep.subr.mxu0 0.0
        %577 = vmatpush1.msra.mxu0 0.0
        %578 = vmatprep.subr.mxu0 0.0
        %579 = vmatpush1.msra.mxu0 0.0
        %580 = vmatprep.subr.mxu0 0.0
        %581 = vmatpush1.msra.mxu0 0.0
        %582 = vmatprep.subr.mxu0 0.0
        %583 = vmatpush1.msra.mxu0 0.0
        %584 = vmatprep.subr.mxu0 0.0
        %585 = vmatpush1.msra.mxu0 0.0
        %586 = vmatprep.subr.mxu0 0.0
        %587 = vmatpush1.msra.mxu0 0.0
        %588 = vmatprep.subr.mxu0 0.0
        %589 = vmatpush1.msra.mxu0 0.0
        %590 = vmatprep.subr.mxu0 0.0
        %591 = vmatpush1.msra.mxu0 0.0
        %592 = vmatprep.subr.mxu0 0.0
        %593 = vmatpush1.msra.mxu0 0.0
        %594 = vmatprep.subr.mxu0 0.0
        %595 = vmatpush1.msra.mxu0 0.0
        %596 = vmatprep.subr.mxu0 0.0
        %597 = vmatpush1.msra.mxu0 0.0
        %598 = vmatprep.subr.mxu0 0.0
        %599 = vmatpush1.msra.mxu0 0.0
        %600 = vmatprep.subr.mxu0 0.0
        %601 = vmatpush1.msra.mxu0 0.0
        %602 = vmatprep.subr.mxu0 0.0
        %603 = vmatpush1.msra.mxu0 0.0
        %604 = vmatprep.subr.mxu0 0.0
        %605 = vmatpush1.msra.mxu0 0.0
        %606 = vmatprep.subr.mxu0 0.0
        %607 = vmatpush1.msra.mxu0 0.0
        %608 = vmatprep.subr.mxu0 0.0
        %609 = vmatpush1.msra.mxu0 0.0
        %610 = vmatprep.subr.mxu0 0.0
        %611 = vmatpush1.msra.mxu0 0.0
        %612 = vmatprep.mubr.f32.mxu0 0.0
        %613 = vmatmul.mubr.f32.gmra.mrb[0].mxu0 %v546
        %v614 = vpop.f32.mrb[0].mxu0
        %v615 = vadd.f32 0.0, %v614
        %v616 = vpop.f32.mrb[0].mxu0
        %617 = vdwg.mxu0
        %v618 = vmax.f32 %v615, 1e-24
        %v619 = vrsqrt.pop %v618
        %vm620 = vcmask 31744
        %v622 = vsel %vm620, %v399, 0
        %v625 = vsel %vm620, %v400, 0
        %vm627 = vcmask 1043456
        %v629 = vsel %vm627, %v619, 0
        %631 = vmatprep.subr.mxu0 0.0
        %632 = vmatpush1.msra.mxu0 %v629
        %633 = vmatprep.subr.mxu0 0.0
        %634 = vmatpush1.msra.mxu0 0.0
        %635 = vmatprep.subr.mxu0 0.0
        %636 = vmatpush1.msra.mxu0 0.0
        %637 = vmatprep.subr.mxu0 0.0
        %638 = vmatpush1.msra.mxu0 0.0
        %639 = vmatprep.subr.mxu0 0.0
        %640 = vmatpush1.msra.mxu0 0.0
        %641 = vmatprep.subr.mxu0 0.0
        %642 = vmatpush1.msra.mxu0 0.0
        %643 = vmatprep.subr.mxu0 0.0
        %644 = vmatpush1.msra.mxu0 0.0
        %645 = vmatprep.subr.mxu0 0.0
        %646 = vmatpush1.msra.mxu0 0.0
        %647 = vmatprep.subr.mxu0 0.0
        %648 = vmatpush1.msra.mxu0 0.0
        %649 = vmatprep.subr.mxu0 0.0
        %650 = vmatpush1.msra.mxu0 0.0
        %651 = vmatprep.subr.mxu0 0.0
        %652 = vmatpush1.msra.mxu0 0.0
        %653 = vmatprep.subr.mxu0 0.0
        %654 = vmatpush1.msra.mxu0 0.0
        %655 = vmatprep.subr.mxu0 0.0
        %656 = vmatpush1.msra.mxu0 0.0
        %657 = vmatprep.subr.mxu0 0.0
        %658 = vmatpush1.msra.mxu0 0.0
        %659 = vmatprep.subr.mxu0 0.0
        %660 = vmatpush1.msra.mxu0 0.0
        %661 = vmatprep.subr.mxu0 0.0
        %662 = vmatpush1.msra.mxu0 0.0
        %663 = vmatprep.subr.mxu0 0.0
        %664 = vmatpush1.msra.mxu0 0.0
        %665 = vmatprep.subr.mxu0 0.0
        %666 = vmatpush1.msra.mxu0 0.0
        %667 = vmatprep.subr.mxu0 0.0
        %668 = vmatpush1.msra.mxu0 0.0
        %669 = vmatprep.subr.mxu0 0.0
        %670 = vmatpush1.msra.mxu0 0.0
        %671 = vmatprep.subr.mxu0 0.0
        %672 = vmatpush1.msra.mxu0 0.0
        %673 = vmatprep.subr.mxu0 0.0
        %674 = vmatpush1.msra.mxu0 0.0
        %675 = vmatprep.subr.mxu0 0.0
        %676 = vmatpush1.msra.mxu0 0.0
        %677 = vmatprep.subr.mxu0 0.0
        %678 = vmatpush1.msra.mxu0 0.0
        %679 = vmatprep.subr.mxu0 0.0
        %680 = vmatpush1.msra.mxu0 0.0
        %681 = vmatprep.subr.mxu0 0.0
        %682 = vmatpush1.msra.mxu0 0.0
        %683 = vmatprep.subr.mxu0 0.0
        %684 = vmatpush1.msra.mxu0 0.0
        %685 = vmatprep.subr.mxu0 0.0
        %686 = vmatpush1.msra.mxu0 0.0
        %687 = vmatprep.subr.mxu0 0.0
        %688 = vmatpush1.msra.mxu0 0.0
        %689 = vmatprep.subr.mxu0 0.0
        %690 = vmatpush1.msra.mxu0 0.0
        %691 = vmatprep.subr.mxu0 0.0
        %692 = vmatpush1.msra.mxu0 0.0
        %693 = vmatprep.subr.mxu0 0.0
        %694 = vmatpush1.msra.mxu0 0.0
        %695 = vmatprep.mubr.f32.mxu0 0.0
        %696 = vmatmul.mubr.f32.gmra.mrb[0].mxu0 %v622
        %v697 = vpop.f32.mrb[0].mxu0
        %v698 = vadd.f32 0.0, %v697
        %v699 = vpop.f32.mrb[0].mxu0
        %700 = vmatprep.mubr.f32.mxu0 0.0
        %701 = vmatmul.mubr.f32.gmra.mrb[0].mxu0 %v625
        %v702 = vpop.f32.mrb[0].mxu0
        %v703 = vadd.f32 0.0, %v702
        %v704 = vpop.f32.mrb[0].mxu0
        %705 = vdwg.mxu0
        %v706 = vmul.f32 %v536, %v698
        %v707 = vmul.f32 %v539, %v703
        %v708 = vtanh.pop %v706
        %v709 = vtanh.pop %v707
        %710 = vst [vmem:[%s341] sm:$0xff] %v708
        %711 = vst [vmem:[%s341 + $0x8] sm:$0xff] %v709
        %v713 = vsel %vm627, %v402, 0
        %715 = vmatprep.subr.mxu0 0.0
        %716 = vmatpush1.msra.mxu0 %v713
        %717 = vmatprep.subr.mxu0 0.0
        %718 = vmatpush1.msra.mxu0 0.0
        %719 = vmatprep.subr.mxu0 0.0
        %720 = vmatpush1.msra.mxu0 0.0
        %721 = vmatprep.subr.mxu0 0.0
        %722 = vmatpush1.msra.mxu0 0.0
        %723 = vmatprep.subr.mxu0 0.0
        %724 = vmatpush1.msra.mxu0 0.0
        %725 = vmatprep.subr.mxu0 0.0
        %726 = vmatpush1.msra.mxu0 0.0
        %727 = vmatprep.subr.mxu0 0.0
        %728 = vmatpush1.msra.mxu0 0.0
        %729 = vmatprep.subr.mxu0 0.0
        %730 = vmatpush1.msra.mxu0 0.0
        %731 = vmatprep.subr.mxu0 0.0
        %732 = vmatpush1.msra.mxu0 0.0
        %733 = vmatprep.subr.mxu0 0.0
        %734 = vmatpush1.msra.mxu0 0.0
        %735 = vmatprep.subr.mxu0 0.0
        %736 = vmatpush1.msra.mxu0 0.0
        %737 = vmatprep.subr.mxu0 0.0
        %738 = vmatpush1.msra.mxu0 0.0
        %739 = vmatprep.subr.mxu0 0.0
        %740 = vmatpush1.msra.mxu0 0.0
        %741 = vmatprep.subr.mxu0 0.0
        %742 = vmatpush1.msra.mxu0 0.0
        %743 = vmatprep.subr.mxu0 0.0
        %744 = vmatpush1.msra.mxu0 0.0
        %745 = vmatprep.subr.mxu0 0.0
        %746 = vmatpush1.msra.mxu0 0.0
        %747 = vmatprep.subr.mxu0 0.0
        %748 = vmatpush1.msra.mxu0 0.0
        %749 = vmatprep.subr.mxu0 0.0
        %750 = vmatpush1.msra.mxu0 0.0
        %751 = vmatprep.subr.mxu0 0.0
        %752 = vmatpush1.msra.mxu0 0.0
        %753 = vmatprep.subr.mxu0 0.0
        %754 = vmatpush1.msra.mxu0 0.0
        %755 = vmatprep.subr.mxu0 0.0
        %756 = vmatpush1.msra.mxu0 0.0
        %757 = vmatprep.subr.mxu0 0.0
        %758 = vmatpush1.msra.mxu0 0.0
        %759 = vmatprep.subr.mxu0 0.0
        %760 = vmatpush1.msra.mxu0 0.0
        %761 = vmatprep.subr.mxu0 0.0
        %762 = vmatpush1.msra.mxu0 0.0
        %763 = vmatprep.subr.mxu0 0.0
        %764 = vmatpush1.msra.mxu0 0.0
        %765 = vmatprep.subr.mxu0 0.0
        %766 = vmatpush1.msra.mxu0 0.0
        %767 = vmatprep.subr.mxu0 0.0
        %768 = vmatpush1.msra.mxu0 0.0
        %769 = vmatprep.subr.mxu0 0.0
        %770 = vmatpush1.msra.mxu0 0.0
        %771 = vmatprep.subr.mxu0 0.0
        %772 = vmatpush1.msra.mxu0 0.0
        %773 = vmatprep.subr.mxu0 0.0
        %774 = vmatpush1.msra.mxu0 0.0
        %775 = vmatprep.subr.mxu0 0.0
        %776 = vmatpush1.msra.mxu0 0.0
        %777 = vmatprep.subr.mxu0 0.0
        %778 = vmatpush1.msra.mxu0 0.0
        %779 = vmatprep.mubr.f32.mxu0 0.0
        %780 = vmatmul.mubr.f32.gmra.mrb[0].mxu0 %v622
        %v781 = vpop.f32.mrb[0].mxu0
        %v782 = vadd.f32 0.0, %v781
        %v783 = vpop.f32.mrb[0].mxu0
        %784 = vmatprep.mubr.f32.mxu0 0.0
        %785 = vmatmul.mubr.f32.gmra.mrb[0].mxu0 %v625
        %v786 = vpop.f32.mrb[0].mxu0
        %v787 = vadd.f32 0.0, %v786
        %v788 = vpop.f32.mrb[0].mxu0
        %789 = vdwg.mxu0
        %v790 = vmul.f32 %v782, %v471
        %v791 = vmul.f32 %v787, %v474
        %v792 = vpack.c.bf16 %v791, %v790
        %v793 = vmul.f32 %v782, %v536
        %v794 = vmul.f32 %v787, %v539
        %v795 = vpack.c.bf16 %v794, %v793
        %796 = vmatprep.subr.bf16.mxu0 0
        %797 = vmatpush1.bf16.msra.mxu0 %v379
        %798 = vmatprep.subr.bf16.mxu0 0
        %799 = vmatpush1.bf16.msra.mxu0 %v380
        %800 = vmatprep.subr.bf16.mxu0 0
        %801 = vmatpush1.bf16.msra.mxu0 %v381
        %802 = vmatprep.subr.bf16.mxu0 0
        %803 = vmatpush1.bf16.msra.mxu0 %v382
        %804 = vmatprep.subr.bf16.mxu0 0
        %805 = vmatpush1.bf16.msra.mxu0 %v383
        %806 = vmatprep.subr.bf16.mxu0 0
        %807 = vmatpush1.bf16.msra.mxu0 %v384
        %808 = vmatprep.subr.bf16.mxu0 0
        %809 = vmatpush1.bf16.msra.mxu0 %v385
        %810 = vmatprep.subr.bf16.mxu0 0
        %811 = vmatpush1.bf16.msra.mxu0 %v386
        %812 = vmatprep.subr.bf16.mxu0 0
        %813 = vmatpush1.bf16.msra.mxu0 0
        %814 = vmatprep.subr.bf16.mxu0 0
        %815 = vmatpush1.bf16.msra.mxu0 0
        %816 = vmatprep.subr.bf16.mxu0 0
        %817 = vmatpush1.bf16.msra.mxu0 0
        %818 = vmatprep.subr.bf16.mxu0 0
        %819 = vmatpush1.bf16.msra.mxu0 0
        %820 = vmatprep.subr.bf16.mxu0 0
        %821 = vmatpush1.bf16.msra.mxu0 0
        %822 = vmatprep.subr.bf16.mxu0 0
        %823 = vmatpush1.bf16.msra.mxu0 0
        %824 = vmatprep.subr.bf16.mxu0 0
        %825 = vmatpush1.bf16.msra.mxu0 0
        %826 = vmatprep.subr.bf16.mxu0 0
        %827 = vmatpush1.bf16.msra.mxu0 0
        %828 = vmatprep.mubr.bf16.mxu0 0
        %829 = vmatmul.mubr.bf16.gmra.mrb[0].mxu0 %v795
        %v830 = vpop.f32.mrb[0].mxu0
        %v831 = vadd.f32 0.0, %v830
        %v832 = vpop.f32.mrb[0].mxu0
        %v833 = vpop.f32.mrb[0].mxu0
        %v834 = vadd.f32 0.0, %v833
        %v835 = vpop.f32.mrb[0].mxu0
        %836 = vdwg.mxu0
        %837 = vmatprep.subr.bf16.mxu0 0
        %838 = vmatpush1.bf16.msra.mxu0 %v391
        %839 = vmatprep.subr.bf16.mxu0 0
        %840 = vmatpush1.bf16.msra.mxu0 %v392
        %841 = vmatprep.subr.bf16.mxu0 0
        %842 = vmatpush1.bf16.msra.mxu0 %v393
        %843 = vmatprep.subr.bf16.mxu0 0
        %844 = vmatpush1.bf16.msra.mxu0 %v394
        %845 = vmatprep.subr.bf16.mxu0 0
        %846 = vmatpush1.bf16.msra.mxu0 %v395
        %847 = vmatprep.subr.bf16.mxu0 0
        %848 = vmatpush1.bf16.msra.mxu0 %v396
        %849 = vmatprep.subr.bf16.mxu0 0
        %850 = vmatpush1.bf16.msra.mxu0 %v397
        %851 = vmatprep.subr.bf16.mxu0 0
        %852 = vmatpush1.bf16.msra.mxu0 %v398
        %853 = vmatprep.subr.bf16.mxu0 0
        %854 = vmatpush1.bf16.msra.mxu0 0
        %855 = vmatprep.subr.bf16.mxu0 0
        %856 = vmatpush1.bf16.msra.mxu0 0
        %857 = vmatprep.subr.bf16.mxu0 0
        %858 = vmatpush1.bf16.msra.mxu0 0
        %859 = vmatprep.subr.bf16.mxu0 0
        %860 = vmatpush1.bf16.msra.mxu0 0
        %861 = vmatprep.subr.bf16.mxu0 0
        %862 = vmatpush1.bf16.msra.mxu0 0
        %863 = vmatprep.subr.bf16.mxu0 0
        %864 = vmatpush1.bf16.msra.mxu0 0
        %865 = vmatprep.subr.bf16.mxu0 0
        %866 = vmatpush1.bf16.msra.mxu0 0
        %867 = vmatprep.subr.bf16.mxu0 0
        %868 = vmatpush1.bf16.msra.mxu0 0
        %869 = vmatprep.mubr.bf16.mxu0 0
        %870 = vmatmul.mubr.bf16.gmra.mrb[0].mxu0 %v792
        %v871 = vpop.f32.mrb[0].mxu0
        %v872 = vadd.f32 %v831, %v871
        %v873 = vpop.f32.mrb[0].mxu0
        %v874 = vpop.f32.mrb[0].mxu0
        %v875 = vadd.f32 %v834, %v874
        %v876 = vpop.f32.mrb[0].mxu0
        %877 = vdwg.mxu0
        %v878 = vld [vmem:[%s334] sm:$0xff]
        %v879 = vld [vmem:[%s334 + $0x8] sm:$0xff]
        %v880 = vadd.f32 %v878, %v872
        %v881 = vadd.f32 %v879, %v875
        %882 = vst.msk [vmem:[%s334] sm:$0xff] %vm408, %v880
        %883 = vst.msk [vmem:[%s334 + $0x8] sm:$0xff] %vm408, %v881
        %s884 = sand.u32 %s192, 1
        %s885 = scalar_lea.sflag [#allocation3], %s884
        %s886 = sand.u32 %s192, 1
        %s887 = smul.addr %s886, 16
        %s888 = scalar_lea.vmem [#allocation2], %s887
        %s889 = sand.u32 %s220, 1
        %s890 = scalar_lea.sflag [#allocation5], %s889
        %s891 = sand.u32 %s220, 1
        %s892 = smul.addr %s891, 16
        %s893 = scalar_lea.vmem [#allocation4], %s892
        // Predicated region
        $region49: #{tpu_custom_call.1} parent=43 // pred_check
          %p894 = pneg %p202
        $region50: #{tpu_custom_call.1} parent=43 // pred_check_branch
          %896 = sbr.rel (%p894) target = $region52
        $region51: #{tpu_custom_call.1} parent=43 // pred_region
          %s898 = ssub.s32 256, 256
          %899 = vsyncadd %s885, %s898
          %s900 = smul.addr %s29, 2
          %s901 = smul.addr %s900, 128
          %s902 = scalar_lea.hbm %s6, %s901
          %s903 = sshll.u32 %s888, 4
          %s904 = int_to_ptr.vmem [resolvable:$true] %s903
          %909 = dma.vmem_to_hbm [thread:$0]  %s904, 256, %s902, %s885, 128, 128, 8
        $region52: #{tpu_custom_call.1} parent=43 // pred_fallthru
          _
        // Predicated region
        $region53: #{tpu_custom_call.1} parent=43 // pred_check
          %p910 = pneg %p230
        $region54: #{tpu_custom_call.1} parent=43 // pred_check_branch
          %912 = sbr.rel (%p910) target = $region56
        $region55: #{tpu_custom_call.1} parent=43 // pred_region
          %s913 = sadd.s32 %s29, %s30
          %s915 = ssub.s32 256, 256
          %916 = vsyncadd %s890, %s915
          %s917 = smul.addr %s913, 128
          %s918 = scalar_lea.hbm %s7, %s917
          %s919 = sshll.u32 %s893, 4
          %s920 = int_to_ptr.vmem [resolvable:$true] %s919
          %925 = dma.vmem_to_hbm [thread:$0]  %s920, 256, %s918, %s890, 128, 256, 8
        $region56: #{tpu_custom_call.1} parent=43 // pred_fallthru
          _
      $region44: #{tpu_custom_call.1} parent=5 // pred_fallthru
        _
      %p926 = scmp.le.s32.totalorder 2, %s20
      // Predicated region
      $region57: #{tpu_custom_call.1} parent=5 // pred_check
        %p927 = pneg %p926
      $region58: #{tpu_custom_call.1} parent=5 // pred_check_branch
        %929 = sbr.rel (%p927) target = $region60
      $region59: #{tpu_custom_call.1} parent=5 // pred_region
        %s930 = ssub.s32 %s20, 2
        // Predicated region
        $region61: #{tpu_custom_call.1} parent=59 // pred_check
          %p931 = pneg %p208
        $region62: #{tpu_custom_call.1} parent=59 // pred_check_branch
          %933 = sbr.rel (%p931) target = $region64
        $region63: #{tpu_custom_call.1} parent=59 // pred_region
          %s934 = sand.u32 %s193, 1
          %s935 = scalar_lea.sflag [#allocation3], %s934
          %s936 = sand.u32 %s193, 1
          %s937 = smul.addr %s936, 16
          %s938 = scalar_lea.vmem [#allocation2], %s937
          %939 = dma.done %s935, 256
        $region64: #{tpu_custom_call.1} parent=59 // pred_fallthru
          _
        // Predicated region
        $region65: #{tpu_custom_call.1} parent=59 // pred_check
          %p940 = pneg %p236
        $region66: #{tpu_custom_call.1} parent=59 // pred_check_branch
          %942 = sbr.rel (%p940) target = $region68
        $region67: #{tpu_custom_call.1} parent=59 // pred_region
          %s943 = sand.u32 %s221, 1
          %s944 = scalar_lea.sflag [#allocation5], %s943
          %s945 = sand.u32 %s221, 1
          %s946 = smul.addr %s945, 16
          %s947 = scalar_lea.vmem [#allocation4], %s946
          %948 = dma.done %s944, 256
        $region68: #{tpu_custom_call.1} parent=59 // pred_fallthru
          _
      $region60: #{tpu_custom_call.1} parent=5 // pred_fallthru
        _
    $region6: #{tpu_custom_call.1} parent=1 // loop_footer
      %s24 = sadd.s32 1, %s20
    $region7: #{tpu_custom_call.1} parent=1 // loop_footer_branch
      %19 = sbr.rel target = $region3
    $region8: #{tpu_custom_call.1} parent=1 // loop_exit
      _
    %949 = vsyncpa [#allocation3], 1
    %s950 = scalar_lea.sflag [#allocation3], 1
    %951 = vsyncpa %s950, 1
    %952 = vsyncpa [#allocation5], 1
    %s953 = scalar_lea.sflag [#allocation5], 1
    %954 = vsyncpa %s953, 1

</llo_original>
